<compile_context>
chip_gen: v5e
topology: v5e:2x2
jax: 0.10.0
libtpu: 0.0.40
codegen_flags: <defaults>
</compile_context>

<pallas_src>
import jax
import jax.numpy as jnp
from jax.experimental import pallas as pl
from jax.experimental.pallas import tpu as pltpu

_BLOCK_TARGET_BYTES = 2 << 20      # ~2 MiB blocks: >85% of HBM roofline, cheap to pipeline
_HEADROOM_BYTES = 2 << 20          # compiler scratch + small fc intermediates
_MAX_BATCH_UNROLL = 16             # bound static unrolling over Bt inside the kernel


# ----------------------------------------------------------------------------
# fused path: one grid step handles Bt whole images (pool + fc + gate + scale)
# ----------------------------------------------------------------------------
def _make_fused_kernel(Bt, HW):
    inv_hw = 1.0 / float(HW)

    def kernel(x_ref, w1_ref, w2_ref, o_ref):
        # x_ref/o_ref: (Bt, C, HW); w1_ref: (Cr, C); w2_ref: (C, Cr)
        xdt = x_ref.dtype
        # 1/HW folded into the ones column -> avg comes straight off the MXU
        # with f32 accumulation and no f32 copy of x.
        ones = jnp.full((HW, 1), inv_hw, dtype=xdt)

        sum_cols, max_cols = [], []
        for b in range(Bt):                                   # static unroll
            xb = x_ref[b]                                      # (C, HW)
            sum_cols.append(
                jnp.dot(xb, ones, preferred_element_type=jnp.float32))      # (C, 1)
            max_cols.append(
                jnp.max(xb, axis=-1, keepdims=True).astype(jnp.float32))    # (C, 1)

        # shared fc applied once to all pooled branches stacked on the lane axis
        pooled = jnp.concatenate(sum_cols + max_cols, axis=-1)               # (C, 2Bt)
        h = jnp.dot(w1_ref[...], pooled, preferred_element_type=jnp.float32) # (Cr, 2Bt)
        h = jnp.maximum(h, 0.0)                                              # ReLU(True)
        y = jnp.dot(w2_ref[...], h, preferred_element_type=jnp.float32)      # (C, 2Bt)

        # fc(avg) + fc(max) == sum of the paired columns
        gate = jax.nn.sigmoid(y[:, :Bt] + y[:, Bt:]).astype(xdt)             # (C, Bt)

        # streaming multiply in the input dtype (only the tiny gate is cast)
        for b in range(Bt):                                   # static unroll
            o_ref[b] = (x_ref[b] * gate[:, b:b + 1]).astype(o_ref.dtype)

    return kernel


# ----------------------------------------------------------------------------
# two-phase fallback: (1) pool per channel slab, (2) tiled broadcast multiply
# ----------------------------------------------------------------------------
def _pool_kernel(x_ref, p_ref):
    # x_ref: (1, Ct, HW) ; p_ref: (1, Ct, 2) f32 -> [spatial sum, spatial max]
    x = x_ref[0]
    s = jnp.sum(x, axis=-1, keepdims=True, dtype=jnp.float32)   # (Ct, 1)
    m = jnp.max(x, axis=-1, keepdims=True).astype(jnp.float32)  # (Ct, 1)
    p_ref[0] = jnp.concatenate([s, m], axis=-1)


def _scale_kernel(x_ref, g_ref, o_ref):
    # x_ref/o_ref: (1, Ct, HW) ; g_ref: (1, Ct, 1) in x dtype
    o_ref[...] = (x_ref[...] * g_ref[...]).astype(o_ref.dtype)


# ----------------------------------------------------------------------------
# sizing helpers
# ----------------------------------------------------------------------------
def _usable_vmem_bytes():
    try:
        cap = int(pltpu.get_tpu_info().vmem_capacity_bytes)
    except Exception:
        cap = 64 << 20          # conservative: v7x physical VMEM
    return max(cap * 3 // 4, 24 << 20)   # ~48 MiB on v7x, ~96 MiB on v5e/v6e


def _pick_batch_tile(B, per_img_bytes, xo_budget):
    divs = [d for d in range(1, min(B, _MAX_BATCH_UNROLL) + 1) if B % d == 0]
    ok = [d for d in divs
          if d * per_img_bytes <= _BLOCK_TARGET_BYTES
          and 4 * d * per_img_bytes <= xo_budget]
    if not ok:
        ok = [1]
    # v7x megacore: prefer a grid length that is even (>= 2 steps)
    even = [d for d in ok if (B // d) >= 2 and (B // d) % 2 == 0]
    return max(even) if even else max(ok)


def _pick_channel_tile(C, HW, itemsize, usable):
    cands = [d for d in range(8, C + 1, 8) if C % d == 0]
    if not cands:
        cands = [C]
    best = cands[0]
    for d in cands:
        blk = d * HW * itemsize
        need = max(4 * blk, 2 * blk + d * HW * 4) + _HEADROOM_BYTES
        if blk <= _BLOCK_TARGET_BYTES and need <= usable:
            best = max(best, d)
    return best


# ----------------------------------------------------------------------------
# wrapper
# ----------------------------------------------------------------------------
def channel_attention(x_nchw, w1, w2, *, batch_tile=None, channel_tile=None,
                      force_two_phase=False):
    """x_nchw: (B, C, H, W). w1: (C//r, C), w2: (C, C//r) -- 1x1 conv weights."""
    B, C, H, W = x_nchw.shape
    Cr = w1.shape[0]
    HW = H * W

    x = x_nchw.reshape(B, C, HW)             # free reshape, native NCHW layout
    w1 = w1.astype(jnp.float32)
    w2 = w2.astype(jnp.float32)
    itemsize = x.dtype.itemsize

    usable = _usable_vmem_bytes()
    per_img = C * HW * itemsize
    w_buf = 2 * (w1.size + w2.size) * 4              # weights are double-buffered
    ones_buf = ((HW + 7) // 8) * 8 * 128 * itemsize  # lane-padded (HW,1) ones column
    xo_budget = usable - w_buf - ones_buf - _HEADROOM_BYTES

    if (not force_two_phase) and xo_budget >= 4 * per_img:
        # ---------------- fused single-pass path ----------------
        Bt = batch_tile if batch_tile is not None else _pick_batch_tile(
            B, per_img, xo_budget)
        assert B % Bt == 0, "batch_tile must divide the batch size"
        vmem_limit = int(min(
            usable,
            max(4 * Bt * per_img + w_buf + ones_buf + _HEADROOM_BYTES, 16 << 20)))

        out = pl.pallas_call(
            _make_fused_kernel(Bt, HW),
            out_shape=jax.ShapeDtypeStruct((B, C, HW), x.dtype),
            grid_spec=pltpu.PrefetchScalarGridSpec(
                num_scalar_prefetch=0,
                grid=(B // Bt,),
                in_specs=[
                    pl.BlockSpec((Bt, C, HW), lambda i: (i, 0, 0)),
                    # constant index_map -> weights are DMA'd once, not per step
                    pl.BlockSpec((Cr, C), lambda i: (0, 0)),
                    pl.BlockSpec((C, Cr), lambda i: (0, 0)),
                ],
                out_specs=pl.BlockSpec((Bt, C, HW), lambda i: (i, 0, 0)),
            ),
            compiler_params=pltpu.CompilerParams(
                dimension_semantics=("parallel",),
                vmem_limit_bytes=vmem_limit,
            ),
        )(x, w1, w2)
        return out.reshape(B, C, H, W)

    # ---------------- two-phase path (large feature maps) ----------------
    # TODO(synk): if even an (8, HW) channel slab exceeds VMEM (HW in the many
    # millions), an additional HW tiling with an accumulating phase-1 grid axis
    # would be needed; not implemented.
    Ct = channel_tile if channel_tile is not None else _pick_channel_tile(
        C, HW, itemsize, usable)
    assert C % Ct == 0, "channel_tile must divide the channel count"
    blk = Ct * HW * itemsize
    lim1 = int(min(usable, max(2 * blk + Ct * HW * 4 + _HEADROOM_BYTES, 16 << 20)))
    lim2 = int(min(usable, max(4 * blk + _HEADROOM_BYTES, 16 << 20)))

    pooled = pl.pallas_call(
        _pool_kernel,
        out_shape=jax.ShapeDtypeStruct((B, C, 2), jnp.float32),
        grid_spec=pltpu.PrefetchScalarGridSpec(
            num_scalar_prefetch=0,
            grid=(B, C // Ct),
            in_specs=[pl.BlockSpec((1, Ct, HW), lambda b, c: (b, c, 0))],
            out_specs=pl.BlockSpec((1, Ct, 2), lambda b, c: (b, c, 0)),
        ),
        compiler_params=pltpu.CompilerParams(
            dimension_semantics=("parallel", "parallel"),
            vmem_limit_bytes=lim1,
        ),
    )(x)

    # fc + sigmoid on the pooled (B, C) vectors is O(B*C*C/r) -- negligible, plain JAX.
    avg = pooled[..., 0] * (1.0 / HW)
    mx = pooled[..., 1]

    def fc(v):
        return jnp.maximum(v @ w1.T, 0.0) @ w2.T

    gate = jax.nn.sigmoid(fc(avg) + fc(mx)).astype(x.dtype)[:, :, None]   # (B, C, 1)

    out = pl.pallas_call(
        _scale_kernel,
        out_shape=jax.ShapeDtypeStruct((B, C, HW), x.dtype),
        grid_spec=pltpu.PrefetchScalarGridSpec(
            num_scalar_prefetch=0,
            grid=(B, C // Ct),
            in_specs=[
                pl.BlockSpec((1, Ct, HW), lambda b, c: (b, c, 0)),
                pl.BlockSpec((1, Ct, 1), lambda b, c: (b, c, 0)),
            ],
            out_specs=pl.BlockSpec((1, Ct, HW), lambda b, c: (b, c, 0)),
        ),
        compiler_params=pltpu.CompilerParams(
            dimension_semantics=("parallel", "parallel"),
            vmem_limit_bytes=lim2,
        ),
    )(x, gate)
    return out.reshape(B, C, H, W)


# ----------------------------------------------------------------------------
# reference + tests
# ----------------------------------------------------------------------------
def _reference(x_nchw, w1, w2):
    avg = jnp.mean(x_nchw, axis=(2, 3))                     # (B, C)
    mx = jnp.max(x_nchw, axis=(2, 3))                       # (B, C)

    def fc(y):
        h = jnp.maximum(y @ w1.T, 0.0)
        return h @ w2.T

    gate = jax.nn.sigmoid(fc(avg) + fc(mx))                 # (B, C)
    return x_nchw * gate[:, :, None, None]


if __name__ == "__main__":
    root = jax.random.PRNGKey(0)

    def run_case(B, C, H, W, r, **kw):
        kx, k1, k2 = jax.random.split(jax.random.fold_in(root, B * 1000 + H), 3)
        Cr = max(C // r, 1)
        x = jax.random.normal(kx, (B, C, H, W), dtype=jnp.float32)
        w1 = jax.random.normal(k1, (Cr, C), dtype=jnp.float32) * (2.0 / C) ** 0.5
        w2 = jax.random.normal(k2, (C, Cr), dtype=jnp.float32) * (2.0 / Cr) ** 0.5
        out = jax.block_until_ready(channel_attention(x, w1, w2, **kw))
        ref = _reference(x, w1, w2)
        assert out.shape == x.shape
        assert jnp.allclose(out, ref, atol=1e-5, rtol=1e-5), (
            f"mismatch vs reference: B={B} C={C} H={H} W={W} kw={kw}")

    # 1) fused path, lane-dense HW (16*16=256), one image/step (even grid for v7x)
    run_case(2, 32, 16, 16, 16)
    # 2) fused path with Bt=2 images packed per block, ragged lane extent HW=64
    run_case(4, 32, 8, 8, 16, batch_tile=2)
    # 3) two-phase fallback path, ragged HW=196, channel-tiled (exercises both kernels)
    run_case(2, 32, 14, 14, 16, force_two_phase=True, channel_tile=8)

    print("KERNEL_OK")
</pallas_src>

<mosaic_0001>
module attributes {stable_mosaic.version = 11 : i64} {
  func.func @kernel(%arg0: i32, %arg1: memref<1x32x256xf32, #tpu.memory_space<vmem>>, %arg2: memref<2x32xf32, #tpu.memory_space<vmem>>, %arg3: memref<32x2xf32, #tpu.memory_space<vmem>>, %arg4: memref<1x32x256xf32, #tpu.memory_space<vmem>>) attributes {dimension_semantics = [#tpu.dimension_semantics<parallel>], iteration_bounds = array<i64: 2>, scalar_prefetch = 0 : i64, scratch_operands = 0 : i64, tpu.core_type = #tpu.core_type<tc>, window_params = [{transform_indices = @transform_0, window_bounds = array<i64: 1, 32, 256>}, {pipeline_mode = #tpu.pipeline_mode<synchronous>, transform_indices = @transform_1, window_bounds = array<i64: 2, 32>}, {pipeline_mode = #tpu.pipeline_mode<synchronous>, transform_indices = @transform_2, window_bounds = array<i64: 32, 2>}, {transform_indices = @transform_3, window_bounds = array<i64: 1, 32, 256>}]} {
    %cst = arith.constant 3.906250e-03 : f32
    %0 = vector.broadcast %cst : f32 to vector<256x1xf32>
    %c0 = arith.constant 0 : index
    %c0_0 = arith.constant 0 : index
    %c0_1 = arith.constant 0 : index
    %1 = vector.load %arg1[%c0, %c0_0, %c0_1] : memref<1x32x256xf32, #tpu.memory_space<vmem>>, vector<1x32x256xf32>
    %2 = vector.shape_cast %1 : vector<1x32x256xf32> to vector<32x256xf32>
    %cst_2 = arith.constant dense<0.000000e+00> : vector<32x1xf32>
    %3 = tpu.matmul %2, %0, %cst_2 {dimension_numbers = #tpu.dot_dimension_numbers<[1], [0], [0], [1], [0, 0, 1, 1], [], []>} : vector<32x256xf32>, vector<256x1xf32>, vector<32x1xf32> -> vector<32x1xf32>
    %cst_3 = arith.constant dense<0xFF800000> : vector<32xf32>
    %4 = vector.multi_reduction <maximumf>, %2, %cst_3 [1] : vector<32x256xf32> to vector<32xf32>
    %5 = vector.shape_cast %4 : vector<32xf32> to vector<32x1xf32>
    %6 = tpu.concatenate %3, %5 in 1 : vector<32x1xf32>, vector<32x1xf32> -> vector<32x2xf32>
    %c0_4 = arith.constant 0 : index
    %c0_5 = arith.constant 0 : index
    %7 = vector.load %arg2[%c0_4, %c0_5] : memref<2x32xf32, #tpu.memory_space<vmem>>, vector<2x32xf32>
    %cst_6 = arith.constant dense<0.000000e+00> : vector<2x2xf32>
    %8 = tpu.matmul %7, %6, %cst_6 {dimension_numbers = #tpu.dot_dimension_numbers<[1], [0], [0], [1], [0, 0, 1, 1], [], []>} : vector<2x32xf32>, vector<32x2xf32>, vector<2x2xf32> -> vector<2x2xf32>
    %cst_7 = arith.constant 0.000000e+00 : f32
    %9 = vector.broadcast %cst_7 : f32 to vector<2x2xf32>
    %10 = arith.maximumf %8, %9 : vector<2x2xf32>
    %c0_8 = arith.constant 0 : index
    %c0_9 = arith.constant 0 : index
    %11 = vector.load %arg3[%c0_8, %c0_9] : memref<32x2xf32, #tpu.memory_space<vmem>>, vector<32x2xf32>
    %cst_10 = arith.constant dense<0.000000e+00> : vector<32x2xf32>
    %12 = tpu.matmul %11, %10, %cst_10 {dimension_numbers = #tpu.dot_dimension_numbers<[1], [0], [0], [1], [0, 0, 1, 1], [], []>} : vector<32x2xf32>, vector<2x2xf32>, vector<32x2xf32> -> vector<32x2xf32>
    %13 = vector.extract_strided_slice %12 {offsets = [0, 0], sizes = [32, 1], strides = [1, 1]} : vector<32x2xf32> to vector<32x1xf32>
    %14 = vector.extract_strided_slice %12 {offsets = [0, 1], sizes = [32, 1], strides = [1, 1]} : vector<32x2xf32> to vector<32x1xf32>
    %15 = arith.addf %13, %14 : vector<32x1xf32>
    %16 = arith.negf %15 : vector<32x1xf32>
    %17 = math.exp %16 : vector<32x1xf32>
    %cst_11 = arith.constant 1.000000e+00 : f32
    %18 = vector.broadcast %cst_11 : f32 to vector<32x1xf32>
    %19 = arith.addf %18, %17 : vector<32x1xf32>
    %20 = arith.divf %18, %19 : vector<32x1xf32>
    %c0_12 = arith.constant 0 : index
    %c0_13 = arith.constant 0 : index
    %c0_14 = arith.constant 0 : index
    %21 = vector.load %arg1[%c0_12, %c0_13, %c0_14] : memref<1x32x256xf32, #tpu.memory_space<vmem>>, vector<1x32x256xf32>
    %22 = vector.shape_cast %21 : vector<1x32x256xf32> to vector<32x256xf32>
    %23 = vector.broadcast %20 : vector<32x1xf32> to vector<32x256xf32>
    %24 = arith.mulf %22, %23 : vector<32x256xf32>
    %c0_15 = arith.constant 0 : index
    %c0_16 = arith.constant 0 : index
    %c0_17 = arith.constant 0 : index
    %25 = vector.load %arg4[%c0_15, %c0_16, %c0_17] : memref<1x32x256xf32, #tpu.memory_space<vmem>>, vector<1x32x256xf32>
    %26 = vector.shape_cast %25 : vector<1x32x256xf32> to vector<32x256xf32>
    %27 = vector.shape_cast %24 : vector<32x256xf32> to vector<1x32x256xf32>
    tpu.vector_store %arg4[%c0_15, %c0_16, %c0_17], %27 {strides = array<i32>} : memref<1x32x256xf32, #tpu.memory_space<vmem>>, vector<1x32x256xf32>,
    return
  }
  func.func @transform_0(%arg0: i32) -> (i32, i32, i32) {
    %c0_i32 = arith.constant 0 : i32
    %c0_i32_0 = arith.constant 0 : i32
    %c0_i32_1 = arith.constant 0 : i32
    return %arg0, %c0_i32, %c0_i32_0 : i32, i32, i32
  }
  func.func @transform_1(%arg0: i32) -> (i32, i32) {
    %c0_i32 = arith.constant 0 : i32
    %c0_i32_0 = arith.constant 0 : i32
    %c0_i32_1 = arith.constant 0 : i32
    return %c0_i32, %c0_i32_0 : i32, i32
  }
  func.func @transform_2(%arg0: i32) -> (i32, i32) {
    %c0_i32 = arith.constant 0 : i32
    %c0_i32_0 = arith.constant 0 : i32
    %c0_i32_1 = arith.constant 0 : i32
    return %c0_i32, %c0_i32_0 : i32, i32
  }
  func.func @transform_3(%arg0: i32) -> (i32, i32, i32) {
    %c0_i32 = arith.constant 0 : i32
    %c0_i32_0 = arith.constant 0 : i32
    %c0_i32_1 = arith.constant 0 : i32
    return %arg0, %c0_i32, %c0_i32_0 : i32, i32, i32
  }
}

</mosaic_0001>

<llo_original>
// kernel: tpu_custom_call.1
$region0: #{tpu_custom_call.1}
  #allocation0 [shape = 'u32[]', space=smem, size = 0x4, offset = 0x4, fixed_abs, tag = 'smem constant byte address 0x4 - core index']
  #allocation1 [shape = 'u32[72,128]{1,0:T(1,128)}', space=vmem, size = 0x9000, scoped, tag = 'internal scratch']
  %s0 = inlined_call_operand.hbm [shape: f32[2,32,256], index: 0, kind: input, shape index: {}]
  %s1 = inlined_call_operand.vmem [shape: f32[2,32], index: 1, kind: input, shape index: {}]
  %s2 = inlined_call_operand.vmem [shape: f32[32,2], index: 2, kind: input, shape index: {}]
  %s3 = inlined_call_operand.hbm [shape: f32[2,32,256], index: 3, kind: output, shape index: {}]
  %s4 = sld [smem:[#allocation0]]
  $region49: #{tpu_custom_call.1} parent=0
    _
  %s6 = ssub.s32 1, %s4
  %s7 = scalar_select 0, %s6, %s4
  $region1: #{tpu_custom_call.1} parent=0
    #allocation2 [shape = 'u8[65536]{0}', space=vmem, size = 0x10000, scoped, tag = 'input window, operand 0']
    #allocation3 [shape = 's32[2]{0}', space=sflag, size = 0x8, scoped, tag = 'scoped memory for tpu_custom_call.1']
    #allocation4 [shape = 's32[2]{0}', space=sflag, size = 0x8, scoped, tag = 'scoped memory for tpu_custom_call.1']
    #allocation5 [shape = 'u8[65536]{0}', space=vmem, size = 0x10000, scoped, tag = 'output window, operand 0']
    %8 = vsyncpa [#allocation3], 0
    %s9 = scalar_lea.sflag [#allocation3], 1
    %10 = vsyncpa %s9, 0
    %11 = vsyncpa [#allocation4], 0
    %s12 = scalar_lea.sflag [#allocation4], 1
    %13 = vsyncpa %s12, 0
    loop: start=0, step=1, limit=4
    $region2: #{tpu_custom_call.1} parent=1 // loop_pre_header
      _
    $region3: #{tpu_custom_call.1} parent=1 // loop_header
      %s15 = sphi 0, %s19
      %p16 = scmp.ge.s32.totalorder %s15, 4
      %s25 = sphi 0, %s27
      %s28 = sphi 0, %s25
      %s29 = sphi 0, %s28
      %s45 = sphi 0, %s29
      %s49 = sphi 0, %s49
      %s51 = sphi 0, %s49
      %s52 = sphi 0, %s51
      %s66 = sphi 0, %s52
      %s70 = sphi 0, %s70
      %s72 = sphi 0, %s70
      %s73 = sphi 0, %s72
      %s87 = sphi 0, %s73
      %s93 = sphi 0, %s95
      %s96 = sphi 0, %s93
      %s97 = sphi 0, %s96
      %s113 = sphi 0, %s97
    $region4: #{tpu_custom_call.1} parent=1 // loop_header_branch
      %18 = sbr.rel (%p16) target = $region8
    $region5: #{tpu_custom_call.1} parent=1 // loop_body
      %s20 = ssub.s32 %s15, 1
      %s21 = ssub.s32 %s15, 2
      %s22 = sadd.s32 %s15, 1
      %s23 = ssub.s32 %s15, %s22
      %p24 = scmp.eq.s32.totalorder %s23, 0
      %s26 = sadd.s32 %s25, 1
      %s27 = scalar_select %p24, %s25, %s26
      %p30 = pneg %p24
      %p31 = scmp.eq.s32.totalorder %s15, 1
      %p32 = por %p30, %p31
      %p33 = scmp.ne.s32.totalorder %s25, %s28
      %p34 = scmp.eq.s32.totalorder %s15, 0
      %p35 = por %p33, %p34
      %p36 = scmp.ne.s32.totalorder %s25, %s28
      %p37 = scmp.eq.s32.totalorder %s20, 1
      %p38 = por %p36, %p37
      %p39 = scmp.ne.s32.totalorder %s28, %s29
      %p40 = scmp.eq.s32.totalorder %s20, 0
      %p41 = por %p39, %p40
      %p42 = scmp.ne.s32.totalorder %s28, %s29
      %p43 = scmp.eq.s32.totalorder %s21, 1
      %p44 = por %p42, %p43
      %p46 = scmp.ne.s32.totalorder %s29, %s45
      %p47 = scmp.eq.s32.totalorder %s21, 0
      %p48 = por %p46, %p47
      %s50 = sadd.s32 %s49, 1
      %p53 = scmp.eq.s32.totalorder %s15, 1
      %p54 = scmp.ne.s32.totalorder %s49, %s51
      %p55 = scmp.eq.s32.totalorder %s15, 0
      %p56 = por %p54, %p55
      %p57 = scmp.ne.s32.totalorder %s49, %s51
      %p58 = scmp.eq.s32.totalorder %s20, 1
      %p59 = por %p57, %p58
      %p60 = scmp.ne.s32.totalorder %s51, %s52
      %p61 = scmp.eq.s32.totalorder %s20, 0
      %p62 = por %p60, %p61
      %p63 = scmp.ne.s32.totalorder %s51, %s52
      %p64 = scmp.eq.s32.totalorder %s21, 1
      %p65 = por %p63, %p64
      %p67 = scmp.ne.s32.totalorder %s52, %s66
      %p68 = scmp.eq.s32.totalorder %s21, 0
      %p69 = por %p67, %p68
      %s71 = sadd.s32 %s70, 1
      %p74 = scmp.eq.s32.totalorder %s15, 1
      %p75 = scmp.ne.s32.totalorder %s70, %s72
      %p76 = scmp.eq.s32.totalorder %s15, 0
      %p77 = por %p75, %p76
      %p78 = scmp.ne.s32.totalorder %s70, %s72
      %p79 = scmp.eq.s32.totalorder %s20, 1
      %p80 = por %p78, %p79
      %p81 = scmp.ne.s32.totalorder %s72, %s73
      %p82 = scmp.eq.s32.totalorder %s20, 0
      %p83 = por %p81, %p82
      %p84 = scmp.ne.s32.totalorder %s72, %s73
      %p85 = scmp.eq.s32.totalorder %s21, 1
      %p86 = por %p84, %p85
      %p88 = scmp.ne.s32.totalorder %s73, %s87
      %p89 = scmp.eq.s32.totalorder %s21, 0
      %p90 = por %p88, %p89
      %s91 = ssub.s32 %s15, %s22
      %p92 = scmp.eq.s32.totalorder %s91, 0
      %s94 = sadd.s32 %s93, 1
      %s95 = scalar_select %p92, %s93, %s94
      %p98 = pneg %p92
      %p99 = scmp.eq.s32.totalorder %s15, 1
      %p100 = por %p98, %p99
      %p101 = scmp.ne.s32.totalorder %s93, %s96
      %p102 = scmp.eq.s32.totalorder %s15, 0
      %p103 = por %p101, %p102
      %p104 = scmp.ne.s32.totalorder %s93, %s96
      %p105 = scmp.eq.s32.totalorder %s20, 1
      %p106 = por %p104, %p105
      %p107 = scmp.ne.s32.totalorder %s96, %s97
      %p108 = scmp.eq.s32.totalorder %s20, 0
      %p109 = por %p107, %p108
      %p110 = scmp.ne.s32.totalorder %s96, %s97
      %p111 = scmp.eq.s32.totalorder %s21, 1
      %p112 = por %p110, %p111
      %p114 = scmp.ne.s32.totalorder %s97, %s113
      %p115 = scmp.eq.s32.totalorder %s21, 0
      %p116 = por %p114, %p115
      %p117 = scmp.le.s32.totalorder 1, %s15
      %p118 = scmp.lt.s32.totalorder %s15, 3
      %p119 = pnand %p117, %p118
      %p120 = pneg %p119
      // Predicated region
      $region9: #{tpu_custom_call.1} parent=5 // pred_check
        _
      $region10: #{tpu_custom_call.1} parent=5 // pred_check_branch
        %122 = sbr.rel (%p119) target = $region12
      $region11: #{tpu_custom_call.1} parent=5 // pred_region
        %s123 = ssub.s32 %s15, 1
        // Predicated region
        $region13: #{tpu_custom_call.1} parent=11 // pred_check
          %p124 = pneg %p62
        $region14: #{tpu_custom_call.1} parent=11 // pred_check_branch
          %126 = sbr.rel (%p124) target = $region16
        $region15: #{tpu_custom_call.1} parent=11 // pred_region
          _
        $region16: #{tpu_custom_call.1} parent=11 // pred_fallthru
          _
        // Predicated region
        $region17: #{tpu_custom_call.1} parent=11 // pred_check
          %p127 = pneg %p83
        $region18: #{tpu_custom_call.1} parent=11 // pred_check_branch
          %129 = sbr.rel (%p127) target = $region20
        $region19: #{tpu_custom_call.1} parent=11 // pred_region
          _
        $region20: #{tpu_custom_call.1} parent=11 // pred_fallthru
          _
      $region12: #{tpu_custom_call.1} parent=5 // pred_fallthru
        _
      %p130 = scmp.lt.s32.totalorder %s15, 2
      // Predicated region
      $region21: #{tpu_custom_call.1} parent=5 // pred_check
        %p131 = pneg %p130
      $region22: #{tpu_custom_call.1} parent=5 // pred_check_branch
        %133 = sbr.rel (%p131) target = $region24
      $region23: #{tpu_custom_call.1} parent=5 // pred_region
        // Predicated region
        $region25: #{tpu_custom_call.1} parent=23 // pred_check
          %p134 = pneg %p35
        $region26: #{tpu_custom_call.1} parent=23 // pred_check_branch
          %136 = sbr.rel (%p134) target = $region28
        $region27: #{tpu_custom_call.1} parent=23 // pred_region
          %s137 = sand.u32 %s25, 1
          %s138 = scalar_lea.sflag [#allocation3], %s137
          %s139 = sand.u32 %s25, 1
          %s140 = smul.addr %s139, 64
          %s141 = scalar_lea.vmem [#allocation2], %s140
          %143 = vsyncadd %s138, 0
          %s144 = smul.addr %s15, 8
          %s145 = smul.addr %s144, 8
          %s146 = scalar_lea.hbm %s0, %s145
          %s147 = sshll.u32 %s146, 4
          %s148 = int_to_ptr.hbm [resolvable:$true] %s147
          %s149 = sshll.u32 %s141, 4
          %s150 = int_to_ptr.vmem [resolvable:$true] %s149
          %155 = dma.hbm_to_vmem [thread:$0]  %s148, 1024, %s150, %s138, 256, 256, 16
        $region28: #{tpu_custom_call.1} parent=23 // pred_fallthru
          _
      $region24: #{tpu_custom_call.1} parent=5 // pred_fallthru
        _
      %p156 = scmp.le.s32.totalorder 1, %s15
      %p157 = scmp.lt.s32.totalorder %s15, 3
      %p158 = pnand %p156, %p157
      %p159 = pneg %p158
      // Predicated region
      $region29: #{tpu_custom_call.1} parent=5 // pred_check
        _
      $region30: #{tpu_custom_call.1} parent=5 // pred_check_branch
        %161 = sbr.rel (%p158) target = $region32
      $region31: #{tpu_custom_call.1} parent=5 // pred_region
        %s162 = ssub.s32 %s15, 1
        %s163 = sand.u32 %s28, 1
        %s164 = scalar_lea.sflag [#allocation3], %s163
        %s165 = sand.u32 %s28, 1
        %s166 = smul.addr %s165, 64
        %s167 = scalar_lea.vmem [#allocation2], %s166
        // Predicated region
        $region33: #{tpu_custom_call.1} parent=31 // pred_check
          %p168 = pneg %p41
        $region34: #{tpu_custom_call.1} parent=31 // pred_check_branch
          %170 = sbr.rel (%p168) target = $region36
        $region35: #{tpu_custom_call.1} parent=31 // pred_region
          %172 = dma.done %s164, 1024
        $region36: #{tpu_custom_call.1} parent=31 // pred_fallthru
          _
        %s173 = sand.u32 %s28, 1
        %s174 = scalar_lea.sflag [#allocation3], %s173
        %s175 = sand.u32 %s28, 1
        %s176 = smul.addr %s175, 64
        %s177 = scalar_lea.vmem [#allocation2], %s176
        %p178 = pneg %p41
        %p179 = pneg %p38
        %p180 = pneg %p62
        %p181 = pneg %p59
        %p182 = pneg %p83
        %p183 = pneg %p80
        %p184 = pneg %p109
        %p185 = pneg %p106
        %s186 = sand.u32 %s96, 1
        %s187 = scalar_lea.sflag [#allocation4], %s186
        %s188 = sand.u32 %s96, 1
        %s189 = smul.addr %s188, 64
        %s190 = scalar_lea.vmem [#allocation5], %s189
        %v191 = vld [vmem:[%s167] sm:$0xff]
        %v192 = vld [vmem:[%s167 + $0x8] sm:$0xff]
        %v193 = vld [vmem:[%s167 + $0x10] sm:$0xff]
        %v194 = vld [vmem:[%s167 + $0x18] sm:$0xff]
        %v195 = vld [vmem:[%s167 + $0x20] sm:$0xff]
        %v196 = vld [vmem:[%s167 + $0x28] sm:$0xff]
        %v197 = vld [vmem:[%s167 + $0x30] sm:$0xff]
        %v198 = vld [vmem:[%s167 + $0x38] sm:$0xff]
        %199 = vmatpush.msra.mxu0 0.00390625
        %200 = vmatpush.msra.mxu0 0.00390625
        %201 = vmatpush.msra.mxu0 0.00390625
        %202 = vmatpush.msra.mxu0 0.00390625
        %203 = vmatpush.msra.mxu0 0.00390625
        %204 = vmatpush.msra.mxu0 0.00390625
        %205 = vmatpush.msra.mxu0 0.00390625
        %206 = vmatpush.msra.mxu0 0.00390625
        %207 = vmatpush.msra.mxu0 0.00390625
        %208 = vmatpush.msra.mxu0 0.00390625
        %209 = vmatpush.msra.mxu0 0.00390625
        %210 = vmatpush.msra.mxu0 0.00390625
        %211 = vmatpush.msra.mxu0 0.00390625
        %212 = vmatpush.msra.mxu0 0.00390625
        %213 = vmatpush.msra.mxu0 0.00390625
        %214 = vmatpush.msra.mxu0 0.00390625
        %215 = vmatmul.f32.gmra.mxu0 %v191
        %v216 = vpop.f32.mrf.mxu0
        %v217 = vadd.f32 0.0, %v216
        %218 = vmatmul.f32.gmra.mxu0 %v193
        %v219 = vpop.f32.mrf.mxu0
        %v220 = vadd.f32 0.0, %v219
        %221 = vmatmul.f32.gmra.mxu0 %v195
        %v222 = vpop.f32.mrf.mxu0
        %v223 = vadd.f32 0.0, %v222
        %224 = vmatmul.f32.gmra.mxu0 %v197
        %v225 = vpop.f32.mrf.mxu0
        %v226 = vadd.f32 0.0, %v225
        %227 = vdwg.mxu0
        %228 = vmatpush.msra.mxu0 0.00390625
        %229 = vmatpush.msra.mxu0 0.00390625
        %230 = vmatpush.msra.mxu0 0.00390625
        %231 = vmatpush.msra.mxu0 0.00390625
        %232 = vmatpush.msra.mxu0 0.00390625
        %233 = vmatpush.msra.mxu0 0.00390625
        %234 = vmatpush.msra.mxu0 0.00390625
        %235 = vmatpush.msra.mxu0 0.00390625
        %236 = vmatpush.msra.mxu0 0.00390625
        %237 = vmatpush.msra.mxu0 0.00390625
        %238 = vmatpush.msra.mxu0 0.00390625
        %239 = vmatpush.msra.mxu0 0.00390625
        %240 = vmatpush.msra.mxu0 0.00390625
        %241 = vmatpush.msra.mxu0 0.00390625
        %242 = vmatpush.msra.mxu0 0.00390625
        %243 = vmatpush.msra.mxu0 0.00390625
        %244 = vmatmul.f32.gmra.mxu0 %v192
        %v245 = vpop.f32.mrf.mxu0
        %v246 = vadd.f32 %v217, %v245
        %247 = vmatmul.f32.gmra.mxu0 %v194
        %v248 = vpop.f32.mrf.mxu0
        %v249 = vadd.f32 %v220, %v248
        %250 = vmatmul.f32.gmra.mxu0 %v196
        %v251 = vpop.f32.mrf.mxu0
        %v252 = vadd.f32 %v223, %v251
        %253 = vmatmul.f32.gmra.mxu0 %v198
        %v254 = vpop.f32.mrf.mxu0
        %v255 = vadd.f32 %v226, %v254
        %256 = vdwg.mxu0
        %v257 = vmax.f32 %v191, %v192
        %258 = vmax.xlane.f32.xlu0 %v257
        %v259 = vpop.xlane.xlu0 %258
        %v260 = vmax.f32 %v193, %v194
        %261 = vmax.xlane.f32.xlu0 %v260
        %v262 = vpop.xlane.xlu0 %261
        %v263 = vmax.f32 %v195, %v196
        %264 = vmax.xlane.f32.xlu0 %v263
        %v265 = vpop.xlane.xlu0 %264
        %v266 = vmax.f32 %v197, %v198
        %267 = vmax.xlane.f32.xlu0 %v266
        %v268 = vpop.xlane.xlu0 %267
        %vm269 = vcmask 7168
        %v270 = vsel %vm269, %v246, %v259
        %v271 = vsel %vm269, %v249, %v262
        %v272 = vsel %vm269, %v252, %v265
        %v273 = vsel %vm269, %v255, %v268
        %v274 = vld [vmem:[%s1] sm:$0x3]
        %vm275 = vcmask 261120
        %v277 = vsel %vm275, %v274, 0
        %279 = vmatpush.msra.mxu0 0.0
        %280 = vmatpush.msra.mxu0 0.0
        %281 = vmatpush.msra.mxu0 0.0
        %282 = vmatpush.msra.mxu0 0.0
        %283 = vmatpush.msra.mxu0 0.0
        %284 = vmatpush.msra.mxu0 0.0
        %285 = vmatpush.msra.mxu0 0.0
        %286 = vmatpush.msra.mxu0 0.0
        %287 = vmatpush.msra.mxu0 0.0
        %288 = vmatpush.msra.mxu0 0.0
        %289 = vmatpush.msra.mxu0 0.0
        %290 = vmatpush.msra.mxu0 0.0
        %291 = vmatpush.msra.mxu0 %v273
        %292 = vmatpush.msra.mxu0 %v272
        %293 = vmatpush.msra.mxu0 %v271
        %294 = vmatpush.msra.mxu0 %v270
        %295 = vmatmul.f32.gmra.mxu0 %v277
        %v296 = vpop.f32.mrf.mxu0
        %v297 = vadd.f32 0.0, %v296
        %298 = vdwg.mxu0
        %v299 = vmax.f32 %v297, 0.0
        %v300 = vld [vmem:[%s2] sm:$0xff]
        %v301 = vld [vmem:[%s2 + $0x8] sm:$0xff]
        %v302 = vld [vmem:[%s2 + $0x10] sm:$0xff]
        %v303 = vld [vmem:[%s2 + $0x18] sm:$0xff]
        %vm304 = vcmask 15360
        %v306 = vsel %vm304, %v300, 0
        %v309 = vsel %vm304, %v301, 0
        %v312 = vsel %vm304, %v302, 0
        %v315 = vsel %vm304, %v303, 0
        %vm317 = vcmask 1041408
        %v319 = vsel %vm317, %v299, 0
        %321 = vmatpush.msra.mxu0 0.0
        %322 = vmatpush.msra.mxu0 0.0
        %323 = vmatpush.msra.mxu0 0.0
        %324 = vmatpush.msra.mxu0 0.0
        %325 = vmatpush.msra.mxu0 0.0
        %326 = vmatpush.msra.mxu0 0.0
        %327 = vmatpush.msra.mxu0 0.0
        %328 = vmatpush.msra.mxu0 0.0
        %329 = vmatpush.msra.mxu0 0.0
        %330 = vmatpush.msra.mxu0 0.0
        %331 = vmatpush.msra.mxu0 0.0
        %332 = vmatpush.msra.mxu0 0.0
        %333 = vmatpush.msra.mxu0 0.0
        %334 = vmatpush.msra.mxu0 0.0
        %335 = vmatpush.msra.mxu0 0.0
        %336 = vmatpush.msra.mxu0 %v319
        %337 = vmatmul.f32.gmra.mxu0 %v306
        %v338 = vpop.f32.mrf.mxu0
        %v339 = vadd.f32 0.0, %v338
        %340 = vmatmul.f32.gmra.mxu0 %v309
        %v341 = vpop.f32.mrf.mxu0
        %v342 = vadd.f32 0.0, %v341
        %343 = vmatmul.f32.gmra.mxu0 %v312
        %v344 = vpop.f32.mrf.mxu0
        %v345 = vadd.f32 0.0, %v344
        %346 = vmatmul.f32.gmra.mxu0 %v315
        %v347 = vpop.f32.mrf.mxu0
        %v348 = vadd.f32 0.0, %v347
        %349 = vdwg.mxu0
        %354 = vrot.lane.b32.xlu0 %v339, 127
        %v355 = vpop.permute.xlu0 %354
        %356 = vrot.lane.b32.xlu0 %v342, 127
        %v357 = vpop.permute.xlu0 %356
        %358 = vrot.lane.b32.xlu0 %v345, 127
        %v359 = vpop.permute.xlu0 %358
        %360 = vrot.lane.b32.xlu0 %v348, 127
        %v361 = vpop.permute.xlu0 %360
        %v366 = vadd.f32 %v339, %v355
        %v367 = vadd.f32 %v342, %v357
        %v368 = vadd.f32 %v345, %v359
        %v369 = vadd.f32 %v348, %v361
        %v370 = vxor.u32 %v366, 2147483648
        %v371 = vxor.u32 %v367, 2147483648
        %v372 = vxor.u32 %v368, 2147483648
        %v373 = vxor.u32 %v369, 2147483648
        %v374 = vmul.f32 %v370, 1.442695
        %v375 = vpow.pop %v374
        %v376 = vmul.f32 %v371, 1.442695
        %v377 = vpow.pop %v376
        %v378 = vmul.f32 %v372, 1.442695
        %v379 = vpow.pop %v378
        %v380 = vmul.f32 %v373, 1.442695
        %v381 = vpow.pop %v380
        %v382 = vadd.f32 %v375, 1.0
        %v383 = vadd.f32 %v377, 1.0
        %v384 = vadd.f32 %v379, 1.0
        %v385 = vadd.f32 %v381, 1.0
        %v386 = vrcp.pop %v382
        %v387 = vmul.f32 %v382, %v386
        %v388 = vsub.f32 1.0, %v387
        %v389 = vmul.f32 %v386, %v388
        %v390 = vadd.f32 %v386, %v389
        %vm391 = vweird.f32 %v382
        %vm392 = vweird.f32 %v386
        %vm393 = vmor %vm391, %vm392
        %v394 = vsel %vm393, %v386, %v390
        %v395 = vand.u32 2147483647, %v382
        %vm396 = vcmp.eq.f32.partialorder %v395, 8.507059e+37
        %v397 = vand.u32 %v382, 2147483648
        %v398 = vor.u32 1.1754944e-38, %v397
        %v399 = vsel %vm396, %v398, %v394
        %v400 = vmul.f32 1.0, %v399
        %v401 = vrcp.pop %v383
        %v402 = vmul.f32 %v383, %v401
        %v403 = vsub.f32 1.0, %v402
        %v404 = vmul.f32 %v401, %v403
        %v405 = vadd.f32 %v401, %v404
        %vm406 = vweird.f32 %v383
        %vm407 = vweird.f32 %v401
        %vm408 = vmor %vm406, %vm407
        %v409 = vsel %vm408, %v401, %v405
        %v410 = vand.u32 2147483647, %v383
        %vm411 = vcmp.eq.f32.partialorder %v410, 8.507059e+37
        %v412 = vand.u32 %v383, 2147483648
        %v413 = vor.u32 1.1754944e-38, %v412
        %v414 = vsel %vm411, %v413, %v409
        %v415 = vmul.f32 1.0, %v414
        %v416 = vrcp.pop %v384
        %v417 = vmul.f32 %v384, %v416
        %v418 = vsub.f32 1.0, %v417
        %v419 = vmul.f32 %v416, %v418
        %v420 = vadd.f32 %v416, %v419
        %vm421 = vweird.f32 %v384
        %vm422 = vweird.f32 %v416
        %vm423 = vmor %vm421, %vm422
        %v424 = vsel %vm423, %v416, %v420
        %v425 = vand.u32 2147483647, %v384
        %vm426 = vcmp.eq.f32.partialorder %v425, 8.507059e+37
        %v427 = vand.u32 %v384, 2147483648
        %v428 = vor.u32 1.1754944e-38, %v427
        %v429 = vsel %vm426, %v428, %v424
        %v430 = vmul.f32 1.0, %v429
        %v431 = vrcp.pop %v385
        %v432 = vmul.f32 %v385, %v431
        %v433 = vsub.f32 1.0, %v432
        %v434 = vmul.f32 %v431, %v433
        %v435 = vadd.f32 %v431, %v434
        %vm436 = vweird.f32 %v385
        %vm437 = vweird.f32 %v431
        %vm438 = vmor %vm436, %vm437
        %v439 = vsel %vm438, %v431, %v435
        %v440 = vand.u32 2147483647, %v385
        %vm441 = vcmp.eq.f32.partialorder %v440, 8.507059e+37
        %v442 = vand.u32 %v385, 2147483648
        %v443 = vor.u32 1.1754944e-38, %v442
        %v444 = vsel %vm441, %v443, %v439
        %v445 = vmul.f32 1.0, %v444
        %447 = vset.pattern.permute.xlu0 0
        %448 = vperm.xlu0 %447, %v400
        %v449 = vpop.permute.xlu0 %448
        %452 = vset.pattern.permute.xlu0 0
        %453 = vperm.xlu0 %452, %v415
        %v454 = vpop.permute.xlu0 %453
        %457 = vset.pattern.permute.xlu0 0
        %458 = vperm.xlu0 %457, %v430
        %v459 = vpop.permute.xlu0 %458
        %462 = vset.pattern.permute.xlu0 0
        %463 = vperm.xlu0 %462, %v445
        %v464 = vpop.permute.xlu0 %463
        %v466 = vmul.f32 %v191, %v449
        %v467 = vmul.f32 %v192, %v449
        %v468 = vmul.f32 %v193, %v454
        %v469 = vmul.f32 %v194, %v454
        %v470 = vmul.f32 %v195, %v459
        %v471 = vmul.f32 %v196, %v459
        %v472 = vmul.f32 %v197, %v464
        %v473 = vmul.f32 %v198, %v464
        %474 = vst [vmem:[%s190] sm:$0xff] %v466
        %475 = vst [vmem:[%s190 + $0x8] sm:$0xff] %v467
        %476 = vst [vmem:[%s190 + $0x10] sm:$0xff] %v468
        %477 = vst [vmem:[%s190 + $0x18] sm:$0xff] %v469
        %478 = vst [vmem:[%s190 + $0x20] sm:$0xff] %v470
        %479 = vst [vmem:[%s190 + $0x28] sm:$0xff] %v471
        %480 = vst [vmem:[%s190 + $0x30] sm:$0xff] %v472
        %481 = vst [vmem:[%s190 + $0x38] sm:$0xff] %v473
        %s482 = sand.u32 %s96, 1
        %s483 = scalar_lea.sflag [#allocation4], %s482
        %s484 = sand.u32 %s96, 1
        %s485 = smul.addr %s484, 64
        %s486 = scalar_lea.vmem [#allocation5], %s485
        // Predicated region
        $region37: #{tpu_custom_call.1} parent=31 // pred_check
          %p487 = pneg %p106
        $region38: #{tpu_custom_call.1} parent=31 // pred_check_branch
          %489 = sbr.rel (%p487) target = $region40
        $region39: #{tpu_custom_call.1} parent=31 // pred_region
          %491 = vsyncadd %s483, 0
          %s492 = smul.addr %s20, 8
          %s493 = smul.addr %s492, 8
          %s494 = scalar_lea.hbm %s3, %s493
          %s495 = sshll.u32 %s486, 4
          %s496 = int_to_ptr.vmem [resolvable:$true] %s495
          %s497 = sshll.u32 %s494, 4
          %s498 = int_to_ptr.hbm [resolvable:$true] %s497
          %503 = dma.vmem_to_hbm [thread:$0]  %s496, 1024, %s498, %s483, 256, 256, 16
        $region40: #{tpu_custom_call.1} parent=31 // pred_fallthru
          _
      $region32: #{tpu_custom_call.1} parent=5 // pred_fallthru
        _
      %p504 = scmp.le.s32.totalorder 2, %s15
      // Predicated region
      $region41: #{tpu_custom_call.1} parent=5 // pred_check
        %p505 = pneg %p504
      $region42: #{tpu_custom_call.1} parent=5 // pred_check_branch
        %507 = sbr.rel (%p505) target = $region44
      $region43: #{tpu_custom_call.1} parent=5 // pred_region
        %s508 = ssub.s32 %s15, 2
        // Predicated region
        $region45: #{tpu_custom_call.1} parent=43 // pred_check
          %p509 = pneg %p112
        $region46: #{tpu_custom_call.1} parent=43 // pred_check_branch
          %511 = sbr.rel (%p509) target = $region48
        $region47: #{tpu_custom_call.1} parent=43 // pred_region
          %s512 = sand.u32 %s97, 1
          %s513 = scalar_lea.sflag [#allocation4], %s512
          %s514 = sand.u32 %s97, 1
          %s515 = smul.addr %s514, 64
          %s516 = scalar_lea.vmem [#allocation5], %s515
          %518 = dma.done %s513, 1024
        $region48: #{tpu_custom_call.1} parent=43 // pred_fallthru
          _
      $region44: #{tpu_custom_call.1} parent=5 // pred_fallthru
        _
    $region6: #{tpu_custom_call.1} parent=1 // loop_footer
      %s19 = sadd.s32 1, %s15
    $region7: #{tpu_custom_call.1} parent=1 // loop_footer_branch
      %14 = sbr.rel target = $region3
    $region8: #{tpu_custom_call.1} parent=1 // loop_exit
      _
    %519 = vsyncpa [#allocation3], 1
    %s520 = scalar_lea.sflag [#allocation3], 1
    %521 = vsyncpa %s520, 1
    %522 = vsyncpa [#allocation4], 1
    %s523 = scalar_lea.sflag [#allocation4], 1
    %524 = vsyncpa %s523, 1

</llo_original>
